<compile_context>
chip_gen: v7x
topology: tpu7x:2x2x1
jax: 0.10.0
libtpu: 0.0.40
codegen_flags: <defaults>
</compile_context>

<pallas_src>
import functools

import jax
import jax.numpy as jnp
import numpy as np
from jax import lax
from jax.experimental import pallas as pl
from jax.experimental.pallas import tpu as pltpu


def _round_up(n: int, m: int) -> int:
    return ((n + m - 1) // m) * m


def _attention_kernel(x_ref, wt_ref, b_ref, v_ref, out_ref, *, chunk_b, s_valid):
    # x_ref:  (Bt, S, D)   padded block of batch rows (S mult of 8, D mult of 128)
    # wt_ref: (D, H)       fc weight, transposed + padded (grid-invariant, resident)
    # b_ref:  (1, H)       fc bias, f32 (resident)
    # v_ref:  (1, H)       v weight row, f32 (resident)
    # out_ref:(Bt, D)      lane-dense output block
    Bt, S, D = x_ref.shape
    n_chunks = Bt // chunk_b

    w = wt_ref[...]
    b = b_ref[...].astype(jnp.float32)
    v = v_ref[...].astype(jnp.float32)

    def process(c):
        idx = c * chunk_b
        r0 = idx if isinstance(idx, int) else pl.multiple_of(idx, chunk_b)
        xc = x_ref[pl.ds(r0, chunk_b)]                                # (cb, S, D)

        # fc + tanh: one flattened MXU GEMM with f32 accumulation.
        xf = xc.reshape(chunk_b * S, D)
        h = jnp.tanh(
            jnp.dot(xf, w, preferred_element_type=jnp.float32) + b)   # (cb*S, H)
        # TODO(synk): if a profile shows the single EUP (tanh over cb*S*H
        # elements) as the binding unit on v6e/v7x, evaluate tanh in bf16
        # there (keep f32 on v5e, which has no bf16 EUP).

        # Energies: VPU multiply + XLU lane reduce over H.  Result keeps the
        # sequence on sublanes so the softmax and weighted sum below need no
        # lane relayout of the scores.
        sc = jnp.sum(h * v, axis=-1, keepdims=True)                   # (cb*S, 1)
        sc = sc.reshape(chunk_b, S, 1)                                # (cb, S, 1)
        if s_valid != S:
            pos = lax.broadcasted_iota(jnp.int32, (chunk_b, S, 1), 1)
            sc = jnp.where(pos < s_valid, sc, -jnp.inf)

        # Softmax over the (sublane) sequence axis, exact reciprocal, f32.
        m = jnp.max(sc, axis=1, keepdims=True)                        # (cb, 1, 1)
        p = jnp.exp(sc - m)                                           # (cb, S, 1)
        alpha = p / jnp.sum(p, axis=1, keepdims=True)                 # (cb, S, 1)

        # Weighted sum on the VPU + XLU (no per-batch M=1 MXU matmuls);
        # alpha stays f32, x is upcast element-wise.
        out = jnp.sum(alpha * xc.astype(jnp.float32), axis=1)         # (cb, D)
        out_ref[pl.ds(r0, chunk_b), :] = out.astype(out_ref.dtype)

    if n_chunks == 1:
        process(0)
    else:
        def body(c, carry):
            process(c)
            return carry
        lax.fori_loop(0, n_chunks, body, jnp.int32(0))


def attention_forward(x, fc_weight, fc_bias, v_weight, *,
                      block_b=256, stream_dtype=None,
                      vmem_budget_bytes=40 << 20,
                      chunk_budget_bytes=8 << 20):
    """Soft attention: out[b] = sum_s softmax_s(v . tanh(W x[b,s] + b)) * x[b,s].

    x: (B, S, D); fc_weight: (H, D); fc_bias: (H,); v_weight: (1, H).

    block_b: cap on batch rows per grid step; the actual Bt is shrunk to the
        VMEM budget and (when B is large enough) so the grid has >= 2 steps
        for megacore sharding on v7x.
    stream_dtype: e.g. jnp.bfloat16 streams x / W at half HBM cost (useful on
        all generations including v5e); post-matmul math / softmax stay f32.
    vmem_budget_bytes: per-step VMEM budget for tile sizing; keep well under
        physical VMEM (64 MiB on v7x, 128 MiB on v5e/v6e).
    chunk_budget_bytes: cap on the f32 intermediates (tanh activations,
        weighted-sum product) of one inner chunk of batch rows.
    """
    B, S, D = x.shape
    H = fc_weight.shape[0]
    out_dtype = x.dtype

    # Pad to hardware tiles: sequence -> sublanes (8), features -> lanes (128).
    # Zero-padding D / H is exact (zero weight rows / cols, v zero-padded);
    # padded sequence positions are masked to -inf before the softmax.
    S_pad = _round_up(S, 8)
    D_pad = _round_up(D, 128)
    H_pad = _round_up(H, 128)

    w_t = jnp.transpose(fc_weight)                                    # (D, H)
    w_t = jnp.pad(w_t, ((0, D_pad - D), (0, H_pad - H)))
    b2d = jnp.pad(fc_bias.reshape(1, H).astype(jnp.float32),
                  ((0, 0), (0, H_pad - H)))
    v2d = jnp.pad(v_weight.reshape(1, H).astype(jnp.float32),
                  ((0, 0), (0, H_pad - H)))

    if stream_dtype is not None:
        x = x.astype(stream_dtype)
        w_t = w_t.astype(stream_dtype)
    itemsize = jnp.dtype(x.dtype).itemsize
    out_itemsize = jnp.dtype(out_dtype).itemsize

    # ---- VMEM-budgeted tile sizing (count ALL live buffers) -----------------
    # Resident weights (default double-buffered) + bias/v (padded to 8 sublanes).
    fixed_bytes = 2 * D_pad * H_pad * itemsize + 2 * 2 * 8 * H_pad * 4
    # Streamed bytes per batch row: 2x-buffered x tile + 2x-buffered output row.
    row_bytes = 2 * S_pad * D_pad * itemsize + 2 * D_pad * out_itemsize
    # f32 per-chunk intermediates per batch row: tanh activations (2x slack for
    # the pre-activation temp) + the weighted-sum product.
    chunk_row_bytes = S_pad * (2 * H_pad + D_pad) * 4

    avail = max(vmem_budget_bytes - fixed_bytes - chunk_budget_bytes,
                8 * row_bytes)
    bt_vmem = max(8, (avail // row_bytes) // 8 * 8)

    b_ceil = _round_up(B, 8)
    bt = min(bt_vmem, _round_up(block_b, 8), b_ceil)
    if b_ceil >= 16:
        # Keep grid length >= 2 so both v7x TensorCores get work.
        bt = min(bt, _round_up(pl.cdiv(b_ceil, 2), 8))
    bt = max(8, bt)
    B_pad = bt * pl.cdiv(B, bt)

    # Inner chunk: bounds the live f32 (chunk*S, H) intermediate while keeping
    # the streamed x block large for DMA amortization.
    cands = [c for c in range(8, bt + 1, 8)
             if bt % c == 0 and c * chunk_row_bytes <= chunk_budget_bytes]
    chunk_b = max(cands) if cands else 8

    if (B_pad, S_pad, D_pad) != (B, S, D):
        x = jnp.pad(x, ((0, B_pad - B), (0, S_pad - S), (0, D_pad - D)))

    vmem_limit = int(min(
        max(5 * (fixed_bytes + bt * row_bytes + chunk_b * chunk_row_bytes) // 4
            + (2 << 20), 8 << 20),
        64 << 20))

    cost = pl.CostEstimate(
        flops=int(2 * B_pad * S_pad * (D_pad * H_pad + H_pad + D_pad)),
        transcendentals=int(B_pad * S_pad * (H_pad + 1)),
        bytes_accessed=int((B_pad * S_pad * D_pad + D_pad * H_pad) * itemsize
                           + 2 * 8 * H_pad * 4
                           + B_pad * D_pad * out_itemsize),
    )

    kernel = functools.partial(_attention_kernel, chunk_b=chunk_b, s_valid=S)

    out = pl.pallas_call(
        kernel,
        out_shape=jax.ShapeDtypeStruct((B_pad, D_pad), out_dtype),
        grid_spec=pltpu.PrefetchScalarGridSpec(
            num_scalar_prefetch=0,
            grid=(B_pad // bt,),
            in_specs=[
                pl.BlockSpec((bt, S_pad, D_pad), lambda i: (i, 0, 0)),
                # Grid-invariant operands: constant index_map, stay resident.
                # TODO(synk): pl.Buffered(1) here would drop the second weight
                # copy; left at the default double-buffering for compile safety.
                pl.BlockSpec((D_pad, H_pad), lambda i: (0, 0)),
                pl.BlockSpec((1, H_pad), lambda i: (0, 0)),
                pl.BlockSpec((1, H_pad), lambda i: (0, 0)),
            ],
            out_specs=pl.BlockSpec((bt, D_pad), lambda i: (i, 0)),
        ),
        compiler_params=pltpu.CompilerParams(
            dimension_semantics=("parallel",),
            vmem_limit_bytes=vmem_limit),
        cost_estimate=cost,
    )(x, w_t, b2d, v2d)

    return out[:B, :D]


def attention_reference(x, fc_weight, fc_bias, v_weight):
    """Pure-JAX reference mirroring the PyTorch module."""
    e = jnp.tanh(jnp.einsum("bsd,hd->bsh", x, fc_weight) + fc_bias)
    e = jnp.einsum("bsh,oh->bso", e, v_weight)               # (B, S, 1)
    alpha = jax.nn.softmax(e, axis=1)
    return jnp.sum(x * alpha, axis=1)                        # (B, D)


if __name__ == "__main__":
    # Small shapes consistent with the module's forward.
    B, S, D_in, H = 2, 8, 32, 32

    key = jax.random.PRNGKey(0)
    kx, kw, kb, kv = jax.random.split(key, 4)

    x = jax.random.normal(kx, (B, S, D_in), dtype=jnp.float32)

    # Deterministic parameter init (uniform, nn.Linear-style bounds).
    bound_fc = 1.0 / np.sqrt(D_in)
    fc_weight = jax.random.uniform(kw, (H, D_in), jnp.float32,
                                   -bound_fc, bound_fc)
    fc_bias = jax.random.uniform(kb, (H,), jnp.float32, -bound_fc, bound_fc)
    bound_v = 1.0 / np.sqrt(H)
    v_weight = jax.random.uniform(kv, (1, H), jnp.float32, -bound_v, bound_v)

    out = jax.block_until_ready(
        attention_forward(x, fc_weight, fc_bias, v_weight))
    ref = attention_reference(x, fc_weight, fc_bias, v_weight)
    assert out.shape == (B, D_in)
    np.testing.assert_allclose(np.asarray(out), np.asarray(ref),
                               rtol=2e-3, atol=2e-3)

    # Second check: non-multiple shapes (S/D/H padding + softmax masking),
    # multi-step grid, and the inner chunk loop (forced via tiny chunk budget).
    B2, S2, D2, H2 = 20, 11, 50, 40
    k2 = jax.random.PRNGKey(1)
    kx2, kw2, kb2, kv2 = jax.random.split(k2, 4)
    x2 = jax.random.normal(kx2, (B2, S2, D2), dtype=jnp.float32)
    w2 = jax.random.normal(kw2, (H2, D2), dtype=jnp.float32) * 0.1
    bb2 = jax.random.normal(kb2, (H2,), dtype=jnp.float32) * 0.1
    vv2 = jax.random.normal(kv2, (1, H2), dtype=jnp.float32) * 0.1
    out2 = jax.block_until_ready(
        attention_forward(x2, w2, bb2, vv2, chunk_budget_bytes=1))
    ref2 = attention_reference(x2, w2, bb2, vv2)
    assert out2.shape == (B2, D2)
    np.testing.assert_allclose(np.asarray(out2), np.asarray(ref2),
                               rtol=2e-3, atol=2e-3)

    print("KERNEL_OK")
</pallas_src>

<mosaic_0001>
module attributes {stable_mosaic.version = 11 : i64} {
  func.func @_attention_kernel(%arg0: i32, %arg1: memref<8x8x128xf32, #tpu.memory_space<vmem>>, %arg2: memref<128x128xf32, #tpu.memory_space<vmem>>, %arg3: memref<1x128xf32, #tpu.memory_space<vmem>>, %arg4: memref<1x128xf32, #tpu.memory_space<vmem>>, %arg5: memref<8x128xf32, #tpu.memory_space<vmem>>) attributes {dimension_semantics = [#tpu.dimension_semantics<parallel>], iteration_bounds = array<i64: 1>, scalar_prefetch = 0 : i64, scratch_operands = 0 : i64, tpu.core_type = #tpu.core_type<tc>, window_params = [{transform_indices = @transform_0, window_bounds = array<i64: 8, 8, 128>}, {pipeline_mode = #tpu.pipeline_mode<synchronous>, transform_indices = @transform_1, window_bounds = array<i64: 128, 128>}, {pipeline_mode = #tpu.pipeline_mode<synchronous>, transform_indices = @transform_2, window_bounds = array<i64: 1, 128>}, {pipeline_mode = #tpu.pipeline_mode<synchronous>, transform_indices = @transform_3, window_bounds = array<i64: 1, 128>}, {transform_indices = @transform_4, window_bounds = array<i64: 8, 128>}]} {
    %c0 = arith.constant 0 : index
    %c0_0 = arith.constant 0 : index
    %0 = vector.load %arg2[%c0, %c0_0] : memref<128x128xf32, #tpu.memory_space<vmem>>, vector<128x128xf32>
    %c0_1 = arith.constant 0 : index
    %c0_2 = arith.constant 0 : index
    %1 = vector.load %arg3[%c0_1, %c0_2] : memref<1x128xf32, #tpu.memory_space<vmem>>, vector<1x128xf32>
    %c0_3 = arith.constant 0 : index
    %c0_4 = arith.constant 0 : index
    %2 = vector.load %arg4[%c0_3, %c0_4] : memref<1x128xf32, #tpu.memory_space<vmem>>, vector<1x128xf32>
    %c0_5 = arith.constant 0 : index
    %c0_6 = arith.constant 0 : index
    %c0_7 = arith.constant 0 : index
    %3 = vector.load %arg1[%c0_5, %c0_6, %c0_7] : memref<8x8x128xf32, #tpu.memory_space<vmem>>, vector<8x8x128xf32>
    %4 = vector.shape_cast %3 : vector<8x8x128xf32> to vector<64x128xf32>
    %cst = arith.constant dense<0.000000e+00> : vector<64x128xf32>
    %5 = tpu.matmul %4, %0, %cst {dimension_numbers = #tpu.dot_dimension_numbers<[1], [0], [0], [1], [0, 0, 1, 1], [], []>} : vector<64x128xf32>, vector<128x128xf32>, vector<64x128xf32> -> vector<64x128xf32>
    %6 = vector.broadcast %1 : vector<1x128xf32> to vector<64x128xf32>
    %7 = arith.addf %5, %6 : vector<64x128xf32>
    %8 = math.tanh %7 : vector<64x128xf32>
    %9 = vector.broadcast %2 : vector<1x128xf32> to vector<64x128xf32>
    %10 = arith.mulf %8, %9 : vector<64x128xf32>
    %cst_8 = arith.constant dense<0.000000e+00> : vector<64xf32>
    %11 = vector.multi_reduction <add>, %10, %cst_8 [1] : vector<64x128xf32> to vector<64xf32>
    %12 = vector.shape_cast %11 : vector<64xf32> to vector<64x1xf32>
    %13 = vector.shape_cast %12 : vector<64x1xf32> to vector<8x8x1xf32>
    %cst_9 = arith.constant dense<0xFF800000> : vector<8x1xf32>
    %14 = vector.multi_reduction <maximumf>, %13, %cst_9 [1] : vector<8x8x1xf32> to vector<8x1xf32>
    %15 = vector.shape_cast %14 : vector<8x1xf32> to vector<8x1x1xf32>
    %16 = vector.broadcast %15 : vector<8x1x1xf32> to vector<8x8x1xf32>
    %17 = arith.subf %13, %16 : vector<8x8x1xf32>
    %18 = math.exp %17 : vector<8x8x1xf32>
    %cst_10 = arith.constant dense<0.000000e+00> : vector<8x1xf32>
    %19 = vector.multi_reduction <add>, %18, %cst_10 [1] : vector<8x8x1xf32> to vector<8x1xf32>
    %20 = vector.shape_cast %19 : vector<8x1xf32> to vector<8x1x1xf32>
    %21 = vector.broadcast %20 : vector<8x1x1xf32> to vector<8x8x1xf32>
    %22 = arith.divf %18, %21 : vector<8x8x1xf32>
    %23 = vector.broadcast %22 : vector<8x8x1xf32> to vector<8x8x128xf32>
    %24 = arith.mulf %23, %3 : vector<8x8x128xf32>
    %cst_11 = arith.constant dense<0.000000e+00> : vector<8x128xf32>
    %25 = vector.multi_reduction <add>, %24, %cst_11 [1] : vector<8x8x128xf32> to vector<8x128xf32>
    %c0_12 = arith.constant 0 : index
    %c0_13 = arith.constant 0 : index
    %26 = vector.load %arg5[%c0_12, %c0_13] : memref<8x128xf32, #tpu.memory_space<vmem>>, vector<8x128xf32>
    tpu.vector_store %arg5[%c0_12, %c0_13], %25 {strides = array<i32>} : memref<8x128xf32, #tpu.memory_space<vmem>>, vector<8x128xf32>,
    return
  }
  func.func @transform_0(%arg0: i32) -> (i32, i32, i32) {
    %c0_i32 = arith.constant 0 : i32
    %c0_i32_0 = arith.constant 0 : i32
    %c0_i32_1 = arith.constant 0 : i32
    return %arg0, %c0_i32, %c0_i32_0 : i32, i32, i32
  }
  func.func @transform_1(%arg0: i32) -> (i32, i32) {
    %c0_i32 = arith.constant 0 : i32
    %c0_i32_0 = arith.constant 0 : i32
    %c0_i32_1 = arith.constant 0 : i32
    return %c0_i32, %c0_i32_0 : i32, i32
  }
  func.func @transform_2(%arg0: i32) -> (i32, i32) {
    %c0_i32 = arith.constant 0 : i32
    %c0_i32_0 = arith.constant 0 : i32
    %c0_i32_1 = arith.constant 0 : i32
    return %c0_i32, %c0_i32_0 : i32, i32
  }
  func.func @transform_3(%arg0: i32) -> (i32, i32) {
    %c0_i32 = arith.constant 0 : i32
    %c0_i32_0 = arith.constant 0 : i32
    %c0_i32_1 = arith.constant 0 : i32
    return %c0_i32, %c0_i32_0 : i32, i32
  }
  func.func @transform_4(%arg0: i32) -> (i32, i32) {
    %c0_i32 = arith.constant 0 : i32
    %c0_i32_0 = arith.constant 0 : i32
    return %arg0, %c0_i32 : i32, i32
  }
}

</mosaic_0001>

<llo_original>
// kernel: tpu_custom_call.1
$region0: #{tpu_custom_call.1}
  #allocation0 [shape = 'u32[]', space=smem, size = 0x4, offset = 0x4, fixed_abs, tag = 'smem constant byte address 0x4 - core index']
  #allocation1 [shape = 'u32[144,128]{1,0:T(1,128)}', space=vmem, size = 0x12000, scoped, tag = 'internal scratch']
  %s0 = inlined_call_operand.hbm [shape: f32[8,8,128], index: 0, kind: input, shape index: {}]
  %s1 = inlined_call_operand.hbm [shape: f32[128,128], index: 1, kind: input, shape index: {}]
  %s2 = inlined_call_operand.vmem [shape: f32[1,128], index: 2, kind: input, shape index: {}]
  %s3 = inlined_call_operand.vmem [shape: f32[1,128], index: 3, kind: input, shape index: {}]
  %s4 = inlined_call_operand.hbm [shape: f32[8,128], index: 4, kind: output, shape index: {}]
  %s5 = sld [smem:[#allocation0]]
  $region34: #{tpu_custom_call.1} parent=0
    _
  %s7 = ssub.s32 1, %s5
  %s8 = scalar_select 0, %s7, %s5
  $region1: #{tpu_custom_call.1} parent=0
    #allocation2 [shape = 'u8[32768]{0}', space=vmem, size = 0x8000, scoped, tag = 'input window, operand 0, single buffered']
    #allocation3 [shape = 's32[1]{0}', space=sflag, size = 0x4, scoped, tag = 'scoped memory for tpu_custom_call.1']
    #allocation4 [shape = 's32[1]{0}', space=sflag, size = 0x4, scoped, tag = 'scoped memory for tpu_custom_call.1']
    #allocation5 [shape = 'u8[65536]{0}', space=vmem, size = 0x10000, scoped, tag = 'input window, operand 1, single buffered']
    #allocation6 [shape = 's32[1]{0}', space=sflag, size = 0x4, scoped, tag = 'scoped memory for tpu_custom_call.1']
    #allocation7 [shape = 'u8[4096]{0}', space=vmem, size = 0x1000, scoped, tag = 'output window, operand 0, single buffered']
    %9 = vsyncpa [#allocation3], 0
    %10 = vsyncpa [#allocation6], 0
    %11 = vsyncpa [#allocation4], 0
    // Predicated region
    $region2: #{tpu_custom_call.1} parent=1 // pred_check
      _
    $region3: #{tpu_custom_call.1} parent=1 // pred_check_branch
      %13 = sbr.rel (0) target = $region5
    $region4: #{tpu_custom_call.1} parent=1 // pred_region
      %s15 = ssub.s32 1024, 1024
      %16 = vsyncadd [#allocation3], %s15
      %s17 = sshll.u32 [#allocation2], 4
      %s18 = int_to_ptr.vmem [resolvable:$true] %s17
      %23 = dma.hbm_to_vmem [thread:$0]  %s0, 1024, %s18, [#allocation3], 128, 128, 8
    $region5: #{tpu_custom_call.1} parent=1 // pred_fallthru
      _
    // Predicated region
    $region6: #{tpu_custom_call.1} parent=1 // pred_check
      _
    $region7: #{tpu_custom_call.1} parent=1 // pred_check_branch
      %25 = sbr.rel (0) target = $region9
    $region8: #{tpu_custom_call.1} parent=1 // pred_region
      %s27 = ssub.s32 2048, 2048
      %28 = vsyncadd [#allocation6], %s27
      %s29 = sshll.u32 [#allocation5], 4
      %s30 = int_to_ptr.vmem [resolvable:$true] %s29
      %35 = dma.hbm_to_vmem [thread:$0]  %s1, 2048, %s30, [#allocation6], 128, 128, 8
    $region9: #{tpu_custom_call.1} parent=1 // pred_fallthru
      _
    // Predicated region
    $region10: #{tpu_custom_call.1} parent=1 // pred_check
      _
    $region11: #{tpu_custom_call.1} parent=1 // pred_check_branch
      %37 = sbr.rel (0) target = $region13
    $region12: #{tpu_custom_call.1} parent=1 // pred_region
      _
    $region13: #{tpu_custom_call.1} parent=1 // pred_fallthru
      _
    // Predicated region
    $region14: #{tpu_custom_call.1} parent=1 // pred_check
      _
    $region15: #{tpu_custom_call.1} parent=1 // pred_check_branch
      %39 = sbr.rel (0) target = $region17
    $region16: #{tpu_custom_call.1} parent=1 // pred_region
      _
    $region17: #{tpu_custom_call.1} parent=1 // pred_fallthru
      _
    // Predicated region
    $region18: #{tpu_custom_call.1} parent=1 // pred_check
      _
    $region19: #{tpu_custom_call.1} parent=1 // pred_check_branch
      %41 = sbr.rel (0) target = $region21
    $region20: #{tpu_custom_call.1} parent=1 // pred_region
      %42 = dma.done [#allocation3], 1024
    $region21: #{tpu_custom_call.1} parent=1 // pred_fallthru
      _
    // Predicated region
    $region22: #{tpu_custom_call.1} parent=1 // pred_check
      _
    $region23: #{tpu_custom_call.1} parent=1 // pred_check_branch
      %44 = sbr.rel (0) target = $region25
    $region24: #{tpu_custom_call.1} parent=1 // pred_region
      %45 = dma.done [#allocation6], 2048
    $region25: #{tpu_custom_call.1} parent=1 // pred_fallthru
      _
    %v46 = vld [vmem:[#allocation5] sm:$0xff]
    %v47 = vld [vmem:[#allocation5 + $0x8] sm:$0xff]
    %v48 = vld [vmem:[#allocation5 + $0x10] sm:$0xff]
    %v49 = vld [vmem:[#allocation5 + $0x18] sm:$0xff]
    %v50 = vld [vmem:[#allocation5 + $0x20] sm:$0xff]
    %v51 = vld [vmem:[#allocation5 + $0x28] sm:$0xff]
    %v52 = vld [vmem:[#allocation5 + $0x30] sm:$0xff]
    %v53 = vld [vmem:[#allocation5 + $0x38] sm:$0xff]
    %v54 = vld [vmem:[#allocation5 + $0x40] sm:$0xff]
    %v55 = vld [vmem:[#allocation5 + $0x48] sm:$0xff]
    %v56 = vld [vmem:[#allocation5 + $0x50] sm:$0xff]
    %v57 = vld [vmem:[#allocation5 + $0x58] sm:$0xff]
    %v58 = vld [vmem:[#allocation5 + $0x60] sm:$0xff]
    %v59 = vld [vmem:[#allocation5 + $0x68] sm:$0xff]
    %v60 = vld [vmem:[#allocation5 + $0x70] sm:$0xff]
    %v61 = vld [vmem:[#allocation5 + $0x78] sm:$0xff]
    %v62 = vld [vmem:[%s2] sm:$0x1]
    %v63 = vld [vmem:[%s3] sm:$0x1]
    %v64 = vld [vmem:[#allocation2] sm:$0xff]
    %v65 = vld [vmem:[#allocation2 + $0x8] sm:$0xff]
    %v66 = vld [vmem:[#allocation2 + $0x10] sm:$0xff]
    %v67 = vld [vmem:[#allocation2 + $0x18] sm:$0xff]
    %v68 = vld [vmem:[#allocation2 + $0x20] sm:$0xff]
    %v69 = vld [vmem:[#allocation2 + $0x28] sm:$0xff]
    %v70 = vld [vmem:[#allocation2 + $0x30] sm:$0xff]
    %v71 = vld [vmem:[#allocation2 + $0x38] sm:$0xff]
    %v73 = vlaneseq
    %v74 = vshrl.u32 %v73, 7
    %v75 = vsub.s32 0, %v74
    %v76 = vrot.slane %v62, %v75
    %78 = vmatprep.subr.mxu0 0.0
    %79 = vmatpush1.msra.mxu0 %v46
    %80 = vmatprep.subr.mxu0 0.0
    %81 = vmatpush1.msra.mxu0 %v47
    %82 = vmatprep.subr.mxu0 0.0
    %83 = vmatpush1.msra.mxu0 %v48
    %84 = vmatprep.subr.mxu0 0.0
    %85 = vmatpush1.msra.mxu0 %v49
    %86 = vmatprep.subr.mxu0 0.0
    %87 = vmatpush1.msra.mxu0 %v50
    %88 = vmatprep.subr.mxu0 0.0
    %89 = vmatpush1.msra.mxu0 %v51
    %90 = vmatprep.subr.mxu0 0.0
    %91 = vmatpush1.msra.mxu0 %v52
    %92 = vmatprep.subr.mxu0 0.0
    %93 = vmatpush1.msra.mxu0 %v53
    %94 = vmatprep.subr.mxu0 0.0
    %95 = vmatpush1.msra.mxu0 %v54
    %96 = vmatprep.subr.mxu0 0.0
    %97 = vmatpush1.msra.mxu0 %v55
    %98 = vmatprep.subr.mxu0 0.0
    %99 = vmatpush1.msra.mxu0 %v56
    %100 = vmatprep.subr.mxu0 0.0
    %101 = vmatpush1.msra.mxu0 %v57
    %102 = vmatprep.subr.mxu0 0.0
    %103 = vmatpush1.msra.mxu0 %v58
    %104 = vmatprep.subr.mxu0 0.0
    %105 = vmatpush1.msra.mxu0 %v59
    %106 = vmatprep.subr.mxu0 0.0
    %107 = vmatpush1.msra.mxu0 %v60
    %108 = vmatprep.subr.mxu0 0.0
    %109 = vmatpush1.msra.mxu0 %v61
    %110 = vmatprep.subr.mxu0 0.0
    %111 = vmatpush1.msra.mxu0 0.0
    %112 = vmatprep.subr.mxu0 0.0
    %113 = vmatpush1.msra.mxu0 0.0
    %114 = vmatprep.subr.mxu0 0.0
    %115 = vmatpush1.msra.mxu0 0.0
    %116 = vmatprep.subr.mxu0 0.0
    %117 = vmatpush1.msra.mxu0 0.0
    %118 = vmatprep.subr.mxu0 0.0
    %119 = vmatpush1.msra.mxu0 0.0
    %120 = vmatprep.subr.mxu0 0.0
    %121 = vmatpush1.msra.mxu0 0.0
    %122 = vmatprep.subr.mxu0 0.0
    %123 = vmatpush1.msra.mxu0 0.0
    %124 = vmatprep.subr.mxu0 0.0
    %125 = vmatpush1.msra.mxu0 0.0
    %126 = vmatprep.subr.mxu0 0.0
    %127 = vmatpush1.msra.mxu0 0.0
    %128 = vmatprep.subr.mxu0 0.0
    %129 = vmatpush1.msra.mxu0 0.0
    %130 = vmatprep.subr.mxu0 0.0
    %131 = vmatpush1.msra.mxu0 0.0
    %132 = vmatprep.subr.mxu0 0.0
    %133 = vmatpush1.msra.mxu0 0.0
    %134 = vmatprep.subr.mxu0 0.0
    %135 = vmatpush1.msra.mxu0 0.0
    %136 = vmatprep.subr.mxu0 0.0
    %137 = vmatpush1.msra.mxu0 0.0
    %138 = vmatprep.subr.mxu0 0.0
    %139 = vmatpush1.msra.mxu0 0.0
    %140 = vmatprep.subr.mxu0 0.0
    %141 = vmatpush1.msra.mxu0 0.0
    %142 = vmatprep.mubr.f32.mxu0 0.0
    %143 = vmatmul.mubr.f32.gmra.mrb[0].mxu0 %v64
    %v144 = vpop.f32.mrb[0].mxu0
    %v145 = vadd.f32 %v76, %v144
    %v146 = vpop.f32.mrb[0].mxu0
    %147 = vmatprep.mubr.f32.mxu0 0.0
    %148 = vmatmul.mubr.f32.gmra.mrb[0].mxu0 %v65
    %v149 = vpop.f32.mrb[0].mxu0
    %v150 = vadd.f32 %v76, %v149
    %v151 = vpop.f32.mrb[0].mxu0
    %152 = vmatprep.mubr.f32.mxu0 0.0
    %153 = vmatmul.mubr.f32.gmra.mrb[0].mxu0 %v66
    %v154 = vpop.f32.mrb[0].mxu0
    %v155 = vadd.f32 %v76, %v154
    %v156 = vpop.f32.mrb[0].mxu0
    %157 = vmatprep.mubr.f32.mxu0 0.0
    %158 = vmatmul.mubr.f32.gmra.mrb[0].mxu0 %v67
    %v159 = vpop.f32.mrb[0].mxu0
    %v160 = vadd.f32 %v76, %v159
    %v161 = vpop.f32.mrb[0].mxu0
    %162 = vmatprep.mubr.f32.mxu0 0.0
    %163 = vmatmul.mubr.f32.gmra.mrb[0].mxu0 %v68
    %v164 = vpop.f32.mrb[0].mxu0
    %v165 = vadd.f32 %v76, %v164
    %v166 = vpop.f32.mrb[0].mxu0
    %167 = vmatprep.mubr.f32.mxu0 0.0
    %168 = vmatmul.mubr.f32.gmra.mrb[0].mxu0 %v69
    %v169 = vpop.f32.mrb[0].mxu0
    %v170 = vadd.f32 %v76, %v169
    %v171 = vpop.f32.mrb[0].mxu0
    %172 = vmatprep.mubr.f32.mxu0 0.0
    %173 = vmatmul.mubr.f32.gmra.mrb[0].mxu0 %v70
    %v174 = vpop.f32.mrb[0].mxu0
    %v175 = vadd.f32 %v76, %v174
    %v176 = vpop.f32.mrb[0].mxu0
    %177 = vmatprep.mubr.f32.mxu0 0.0
    %178 = vmatmul.mubr.f32.gmra.mrb[0].mxu0 %v71
    %v179 = vpop.f32.mrb[0].mxu0
    %v180 = vadd.f32 %v76, %v179
    %v181 = vpop.f32.mrb[0].mxu0
    %182 = vdwg.mxu0
    %v183 = vtanh.pop %v145
    %v184 = vtanh.pop %v150
    %v185 = vtanh.pop %v155
    %v186 = vtanh.pop %v160
    %v187 = vtanh.pop %v165
    %v188 = vtanh.pop %v170
    %v189 = vtanh.pop %v175
    %v190 = vtanh.pop %v180
    %v192 = vlaneseq
    %v193 = vshrl.u32 %v192, 7
    %v194 = vsub.s32 0, %v193
    %v195 = vrot.slane %v63, %v194
    %v197 = vmul.f32 %v183, %v195
    %v198 = vmul.f32 %v184, %v195
    %v199 = vmul.f32 %v185, %v195
    %v200 = vmul.f32 %v186, %v195
    %v201 = vmul.f32 %v187, %v195
    %v202 = vmul.f32 %v188, %v195
    %v203 = vmul.f32 %v189, %v195
    %v204 = vmul.f32 %v190, %v195
    %205 = vadd.xlane.f32.xlu0 %v197
    %v206 = vpop.xlane.xlu0 %205
    %207 = vadd.xlane.f32.xlu0 %v198
    %v208 = vpop.xlane.xlu0 %207
    %209 = vadd.xlane.f32.xlu0 %v199
    %v210 = vpop.xlane.xlu0 %209
    %211 = vadd.xlane.f32.xlu0 %v200
    %v212 = vpop.xlane.xlu0 %211
    %213 = vadd.xlane.f32.xlu0 %v201
    %v214 = vpop.xlane.xlu0 %213
    %215 = vadd.xlane.f32.xlu0 %v202
    %v216 = vpop.xlane.xlu0 %215
    %217 = vadd.xlane.f32.xlu0 %v203
    %v218 = vpop.xlane.xlu0 %217
    %219 = vadd.xlane.f32.xlu0 %v204
    %v220 = vpop.xlane.xlu0 %219
    %v221 = vrot.slane %v206, 4
    %v222 = vmax.f32 %v206, %v221
    %v223 = vrot.slane %v222, 2
    %v224 = vmax.f32 %v222, %v223
    %v225 = vrot.slane %v224, 1
    %v226 = vmax.f32 %v224, %v225
    %v227 = vrot.slane %v208, 4
    %v228 = vmax.f32 %v208, %v227
    %v229 = vrot.slane %v228, 2
    %v230 = vmax.f32 %v228, %v229
    %v231 = vrot.slane %v230, 1
    %v232 = vmax.f32 %v230, %v231
    %v233 = vrot.slane %v210, 4
    %v234 = vmax.f32 %v210, %v233
    %v235 = vrot.slane %v234, 2
    %v236 = vmax.f32 %v234, %v235
    %v237 = vrot.slane %v236, 1
    %v238 = vmax.f32 %v236, %v237
    %v239 = vrot.slane %v212, 4
    %v240 = vmax.f32 %v212, %v239
    %v241 = vrot.slane %v240, 2
    %v242 = vmax.f32 %v240, %v241
    %v243 = vrot.slane %v242, 1
    %v244 = vmax.f32 %v242, %v243
    %v245 = vrot.slane %v214, 4
    %v246 = vmax.f32 %v214, %v245
    %v247 = vrot.slane %v246, 2
    %v248 = vmax.f32 %v246, %v247
    %v249 = vrot.slane %v248, 1
    %v250 = vmax.f32 %v248, %v249
    %v251 = vrot.slane %v216, 4
    %v252 = vmax.f32 %v216, %v251
    %v253 = vrot.slane %v252, 2
    %v254 = vmax.f32 %v252, %v253
    %v255 = vrot.slane %v254, 1
    %v256 = vmax.f32 %v254, %v255
    %v257 = vrot.slane %v218, 4
    %v258 = vmax.f32 %v218, %v257
    %v259 = vrot.slane %v258, 2
    %v260 = vmax.f32 %v258, %v259
    %v261 = vrot.slane %v260, 1
    %v262 = vmax.f32 %v260, %v261
    %v263 = vrot.slane %v220, 4
    %v264 = vmax.f32 %v220, %v263
    %v265 = vrot.slane %v264, 2
    %v266 = vmax.f32 %v264, %v265
    %v267 = vrot.slane %v266, 1
    %v268 = vmax.f32 %v266, %v267
    %v269 = vsub.f32 %v206, %v226
    %v270 = vsub.f32 %v208, %v232
    %v271 = vsub.f32 %v210, %v238
    %v272 = vsub.f32 %v212, %v244
    %v273 = vsub.f32 %v214, %v250
    %v274 = vsub.f32 %v216, %v256
    %v275 = vsub.f32 %v218, %v262
    %v276 = vsub.f32 %v220, %v268
    %v277 = vmul.f32 %v269, 1.442695
    %v278 = vpow.pop %v277
    %v279 = vmul.f32 %v270, 1.442695
    %v280 = vpow.pop %v279
    %v281 = vmul.f32 %v271, 1.442695
    %v282 = vpow.pop %v281
    %v283 = vmul.f32 %v272, 1.442695
    %v284 = vpow.pop %v283
    %v285 = vmul.f32 %v273, 1.442695
    %v286 = vpow.pop %v285
    %v287 = vmul.f32 %v274, 1.442695
    %v288 = vpow.pop %v287
    %v289 = vmul.f32 %v275, 1.442695
    %v290 = vpow.pop %v289
    %v291 = vmul.f32 %v276, 1.442695
    %v292 = vpow.pop %v291
    %v293 = vrot.slane %v278, 4
    %v294 = vadd.f32 %v278, %v293
    %v295 = vrot.slane %v294, 2
    %v296 = vadd.f32 %v294, %v295
    %v297 = vrot.slane %v296, 1
    %v298 = vadd.f32 %v296, %v297
    %v299 = vrot.slane %v280, 4
    %v300 = vadd.f32 %v280, %v299
    %v301 = vrot.slane %v300, 2
    %v302 = vadd.f32 %v300, %v301
    %v303 = vrot.slane %v302, 1
    %v304 = vadd.f32 %v302, %v303
    %v305 = vrot.slane %v282, 4
    %v306 = vadd.f32 %v282, %v305
    %v307 = vrot.slane %v306, 2
    %v308 = vadd.f32 %v306, %v307
    %v309 = vrot.slane %v308, 1
    %v310 = vadd.f32 %v308, %v309
    %v311 = vrot.slane %v284, 4
    %v312 = vadd.f32 %v284, %v311
    %v313 = vrot.slane %v312, 2
    %v314 = vadd.f32 %v312, %v313
    %v315 = vrot.slane %v314, 1
    %v316 = vadd.f32 %v314, %v315
    %v317 = vrot.slane %v286, 4
    %v318 = vadd.f32 %v286, %v317
    %v319 = vrot.slane %v318, 2
    %v320 = vadd.f32 %v318, %v319
    %v321 = vrot.slane %v320, 1
    %v322 = vadd.f32 %v320, %v321
    %v323 = vrot.slane %v288, 4
    %v324 = vadd.f32 %v288, %v323
    %v325 = vrot.slane %v324, 2
    %v326 = vadd.f32 %v324, %v325
    %v327 = vrot.slane %v326, 1
    %v328 = vadd.f32 %v326, %v327
    %v329 = vrot.slane %v290, 4
    %v330 = vadd.f32 %v290, %v329
    %v331 = vrot.slane %v330, 2
    %v332 = vadd.f32 %v330, %v331
    %v333 = vrot.slane %v332, 1
    %v334 = vadd.f32 %v332, %v333
    %v335 = vrot.slane %v292, 4
    %v336 = vadd.f32 %v292, %v335
    %v337 = vrot.slane %v336, 2
    %v338 = vadd.f32 %v336, %v337
    %v339 = vrot.slane %v338, 1
    %v340 = vadd.f32 %v338, %v339
    %v341 = vrcp.pop %v298
    %v342 = vmul.f32 %v278, %v341
    %v343 = vrcp.pop %v304
    %v344 = vmul.f32 %v280, %v343
    %v345 = vrcp.pop %v310
    %v346 = vmul.f32 %v282, %v345
    %v347 = vrcp.pop %v316
    %v348 = vmul.f32 %v284, %v347
    %v349 = vrcp.pop %v322
    %v350 = vmul.f32 %v286, %v349
    %v351 = vrcp.pop %v328
    %v352 = vmul.f32 %v288, %v351
    %v353 = vrcp.pop %v334
    %v354 = vmul.f32 %v290, %v353
    %v355 = vrcp.pop %v340
    %v356 = vmul.f32 %v292, %v355
    %v357 = vmul.f32 %v342, %v64
    %v358 = vmul.f32 %v344, %v65
    %v359 = vmul.f32 %v346, %v66
    %v360 = vmul.f32 %v348, %v67
    %v361 = vmul.f32 %v350, %v68
    %v362 = vmul.f32 %v352, %v69
    %v363 = vmul.f32 %v354, %v70
    %v364 = vmul.f32 %v356, %v71
    %v365 = vrot.slane %v357, 4
    %v366 = vadd.f32 %v357, %v365
    %v367 = vrot.slane %v366, 2
    %v368 = vadd.f32 %v366, %v367
    %v369 = vrot.slane %v368, 1
    %v370 = vadd.f32 %v368, %v369
    %v371 = vrot.slane %v358, 4
    %v372 = vadd.f32 %v358, %v371
    %v373 = vrot.slane %v372, 2
    %v374 = vadd.f32 %v372, %v373
    %v375 = vrot.slane %v374, 1
    %v376 = vadd.f32 %v374, %v375
    %v377 = vrot.slane %v359, 4
    %v378 = vadd.f32 %v359, %v377
    %v379 = vrot.slane %v378, 2
    %v380 = vadd.f32 %v378, %v379
    %v381 = vrot.slane %v380, 1
    %v382 = vadd.f32 %v380, %v381
    %v383 = vrot.slane %v360, 4
    %v384 = vadd.f32 %v360, %v383
    %v385 = vrot.slane %v384, 2
    %v386 = vadd.f32 %v384, %v385
    %v387 = vrot.slane %v386, 1
    %v388 = vadd.f32 %v386, %v387
    %v389 = vrot.slane %v361, 4
    %v390 = vadd.f32 %v361, %v389
    %v391 = vrot.slane %v390, 2
    %v392 = vadd.f32 %v390, %v391
    %v393 = vrot.slane %v392, 1
    %v394 = vadd.f32 %v392, %v393
    %v395 = vrot.slane %v362, 4
    %v396 = vadd.f32 %v362, %v395
    %v397 = vrot.slane %v396, 2
    %v398 = vadd.f32 %v396, %v397
    %v399 = vrot.slane %v398, 1
    %v400 = vadd.f32 %v398, %v399
    %v401 = vrot.slane %v363, 4
    %v402 = vadd.f32 %v363, %v401
    %v403 = vrot.slane %v402, 2
    %v404 = vadd.f32 %v402, %v403
    %v405 = vrot.slane %v404, 1
    %v406 = vadd.f32 %v404, %v405
    %v407 = vrot.slane %v364, 4
    %v408 = vadd.f32 %v364, %v407
    %v409 = vrot.slane %v408, 2
    %v410 = vadd.f32 %v408, %v409
    %v411 = vrot.slane %v410, 1
    %v412 = vadd.f32 %v410, %v411
    %vm421 = vcmask 1041409
    %v422 = vsel %vm421, %v376, %v370
    %vm423 = vcmask 1042434
    %v424 = vsel %vm423, %v382, %v422
    %vm425 = vcmask 1043459
    %v426 = vsel %vm425, %v388, %v424
    %vm427 = vcmask 1044484
    %v428 = vsel %vm427, %v394, %v426
    %vm429 = vcmask 1045509
    %v430 = vsel %vm429, %v400, %v428
    %vm431 = vcmask 1046534
    %v432 = vsel %vm431, %v406, %v430
    %vm433 = vcmask 1047559
    %v434 = vsel %vm433, %v412, %v432
    %436 = vst [vmem:[#allocation7] sm:$0xff] %v434
    // Predicated region
    $region26: #{tpu_custom_call.1} parent=1 // pred_check
      _
    $region27: #{tpu_custom_call.1} parent=1 // pred_check_branch
      %438 = sbr.rel (0) target = $region29
    $region28: #{tpu_custom_call.1} parent=1 // pred_region
      %s440 = ssub.s32 128, 128
      %441 = vsyncadd [#allocation4], %s440
      %s443 = sshll.u32 [#allocation7], 4
      %s444 = int_to_ptr.vmem [resolvable:$true] %s443
      %446 = dma.vmem_to_hbm [thread:$0]  %s444, 128, %s4, [#allocation4]
    $region29: #{tpu_custom_call.1} parent=1 // pred_fallthru
      _
    // Predicated region
    $region30: #{tpu_custom_call.1} parent=1 // pred_check
      _
    $region31: #{tpu_custom_call.1} parent=1 // pred_check_branch
      %448 = sbr.rel (0) target = $region33
    $region32: #{tpu_custom_call.1} parent=1 // pred_region
      %449 = dma.done [#allocation4], 128
    $region33: #{tpu_custom_call.1} parent=1 // pred_fallthru
      _
    %450 = vsyncpa [#allocation3], 1
    %451 = vsyncpa [#allocation6], 1
    %452 = vsyncpa [#allocation4], 1

</llo_original>
